<compile_context>
chip_gen: v7x
topology: tpu7x:2x2x1
jax: 0.10.0
libtpu: 0.0.40
codegen_flags: <defaults>
</compile_context>

<pallas_src>
import functools

import jax
import jax.numpy as jnp
from jax.experimental import pallas as pl
from jax.experimental.pallas import tpu as pltpu


_LANE = 128
_TILE_BUDGET_BYTES = 4 * 1024 * 1024      # per-tile budget (input or output tile)
_VMEM_LIMIT_BYTES = 32 * 1024 * 1024      # covers double-buffered in+out everywhere


def _round_up(a, b):
    return ((a + b - 1) // b) * b


def _pick_tiles(rows, hw, itemsize):
    """Dtype-aware tile sizes.

    t_hw: lane-dense (multiple of 128), capped at 2048.
    t_r : multiple of the sublane packing granule, sized to ~_TILE_BUDGET_BYTES,
          but small enough that the parallel row axis gets >= 2 blocks when the
          row count allows it (megacore sharding for Pass 1).
    """
    itemsize = max(int(itemsize), 1)
    granule = max(8, 32 // itemsize)                      # f32->8, bf16->16, int8->32
    t_hw = min(2048, _round_up(hw, _LANE))
    budget_rows = (_TILE_BUDGET_BYTES // (t_hw * itemsize)) // granule * granule
    budget_rows = max(granule, budget_rows)
    half_rows = max(granule, _round_up(pl.cdiv(rows, 2), granule))
    t_r = min(budget_rows, half_rows)
    return t_r, t_hw


# ---------------------------------------------------------------------------
# Pass 1: pooled sum / max, accumulated into resident lane-dense (t_r, 128) blocks
# ---------------------------------------------------------------------------
def _accum(x, j, sum_ref, max_ref, *, t_hw, hw_true, masked):
    """Fold one (t_r, t_hw) tile into the (t_r, 128) running sum / max.

    Pure VALU adds/maxes over the lane-aligned 128-wide sub-slices (no XLU,
    no cross-lane movement).  `masked` is only True for the ragged last HW tile.
    """
    n_sub = t_hw // _LANE
    if masked:
        iota = jax.lax.broadcasted_iota(jnp.int32, (1, _LANE), 1)
    part_sum = None
    part_max = None
    for k in range(n_sub):
        xs = x[:, k * _LANE:(k + 1) * _LANE].astype(jnp.float32)
        if masked:
            col = iota + (j * t_hw + k * _LANE)
            keep = col < hw_true
            xs_sum = jnp.where(keep, xs, 0.0)
            xs_max = jnp.where(keep, xs, -jnp.inf)
        else:
            xs_sum = xs
            xs_max = xs
        part_sum = xs_sum if part_sum is None else part_sum + xs_sum
        part_max = xs_max if part_max is None else jnp.maximum(part_max, xs_max)
    sum_ref[...] = sum_ref[...] + part_sum
    max_ref[...] = jnp.maximum(max_ref[...], part_max)


def _pool_kernel(x_ref, sum_ref, max_ref, *, t_hw, hw_true, hw_ragged):
    j = pl.program_id(1)                       # HW-tile index (reduction axis)

    @pl.when(j == 0)
    def _():
        sum_ref[...] = jnp.zeros_like(sum_ref)
        max_ref[...] = jnp.full_like(max_ref, -jnp.inf)

    x = x_ref[...]                             # (t_r, t_hw), input dtype

    if hw_ragged:
        last = pl.num_programs(1) - 1

        @pl.when(j < last)                     # full tiles: no mask work at all
        def _():
            _accum(x, j, sum_ref, max_ref, t_hw=t_hw, hw_true=hw_true, masked=False)

        @pl.when(j == last)                    # ragged tail only: mask sum AND max
        def _():
            _accum(x, j, sum_ref, max_ref, t_hw=t_hw, hw_true=hw_true, masked=True)
    else:
        _accum(x, j, sum_ref, max_ref, t_hw=t_hw, hw_true=hw_true, masked=False)


# ---------------------------------------------------------------------------
# Pass 2: broadcast multiply by the per-row gate, in the input dtype
# ---------------------------------------------------------------------------
def _scale_kernel(x_ref, g_ref, o_ref):
    o_ref[...] = x_ref[...] * g_ref[...]       # (t_r, t_hw) * (t_r, 1)


def channel_atte(x, w1, b1, w2, b2):
    """x: (N, C, H, W) NCHW.  w1: (C//r, C), b1: (C//r,), w2: (C, C//r), b2: (C,).
    Returns same shape/dtype as x."""
    N, C, H, W = x.shape
    HW = H * W
    R = N * C

    x2 = x.reshape(R, HW)                      # free view under jit (no copy)

    t_r, t_hw = _pick_tiles(R, HW, jnp.dtype(x.dtype).itemsize)
    grid = (pl.cdiv(R, t_r), pl.cdiv(HW, t_hw))
    hw_ragged = (HW % t_hw) != 0

    # ---- Pass 1: streaming pooled sum / max (lane-dense partials) ----------
    pooled_sum, pooled_max = pl.pallas_call(
        functools.partial(_pool_kernel, t_hw=t_hw, hw_true=HW, hw_ragged=hw_ragged),
        out_shape=(
            jax.ShapeDtypeStruct((R, _LANE), jnp.float32),
            jax.ShapeDtypeStruct((R, _LANE), jnp.float32),
        ),
        grid_spec=pltpu.PrefetchScalarGridSpec(
            num_scalar_prefetch=0,
            grid=grid,
            in_specs=[pl.BlockSpec((t_r, t_hw), lambda i, j: (i, j))],
            out_specs=[
                pl.BlockSpec((t_r, _LANE), lambda i, j: (i, 0)),
                pl.BlockSpec((t_r, _LANE), lambda i, j: (i, 0)),
            ],
        ),
        compiler_params=pltpu.CompilerParams(
            dimension_semantics=("parallel", "arbitrary"),
            vmem_limit_bytes=_VMEM_LIMIT_BYTES,
        ),
    )(x2)

    # ---- Tiny shared MLP + sigmoid gate on pooled (N, C): plain JAX --------
    # (Batched over N as real matmuls; hoisted out of the per-tile kernels.)
    avg = (jnp.sum(pooled_sum, axis=1) * (1.0 / jnp.float32(HW))).reshape(N, C)
    mx = jnp.max(pooled_max, axis=1).reshape(N, C)

    w1f = w1.astype(jnp.float32)
    b1f = b1.astype(jnp.float32)
    w2f = w2.astype(jnp.float32)
    b2f = b2.astype(jnp.float32)

    def mlp(v):                                # v: (N, C)
        h = jnp.maximum(v @ w1f.T + b1f, 0.0)  # (N, Cr)
        return h @ w2f.T + b2f                 # (N, C)

    gate = jax.nn.sigmoid(mlp(avg) + mlp(mx))  # (N, C) f32
    gate_rows = gate.reshape(R, 1).astype(x.dtype)

    # ---- Pass 2: broadcast multiply; partial edge stores clipped by Pallas --
    out2 = pl.pallas_call(
        _scale_kernel,
        out_shape=jax.ShapeDtypeStruct((R, HW), x.dtype),
        grid_spec=pltpu.PrefetchScalarGridSpec(
            num_scalar_prefetch=0,
            grid=grid,
            in_specs=[
                pl.BlockSpec((t_r, t_hw), lambda i, j: (i, j)),
                pl.BlockSpec((t_r, 1), lambda i, j: (i, 0)),
            ],
            out_specs=pl.BlockSpec((t_r, t_hw), lambda i, j: (i, j)),
        ),
        compiler_params=pltpu.CompilerParams(
            dimension_semantics=("parallel", "parallel"),
            vmem_limit_bytes=_VMEM_LIMIT_BYTES,
        ),
    )(x2, gate_rows)

    return out2.reshape(N, C, H, W)


def reference(x, w1, b1, w2, b2):
    """Pure-JAX reference mirroring the PyTorch forward."""
    xf = x.astype(jnp.float32)
    avg = jnp.mean(xf, axis=(2, 3))                # (N, C)
    mx = jnp.max(xf, axis=(2, 3))                  # (N, C)

    def mlp(v):
        h = jnp.maximum(v @ w1.T + b1, 0.0)
        return h @ w2.T + b2

    gate = jax.nn.sigmoid(mlp(avg) + mlp(mx))      # (N, C)
    return (xf * gate[:, :, None, None]).astype(x.dtype)


if __name__ == "__main__":
    # Module config: dim=2, in_channels=4, ratio=2
    N, C, H, W = 2, 4, 16, 16
    ratio = 2
    Cr = C // ratio

    key = jax.random.PRNGKey(0)
    kx, kw1, kb1, kw2, kb2 = jax.random.split(key, 5)

    x = jax.random.normal(kx, (N, C, H, W), dtype=jnp.float32)
    # fc1: Conv2d(C, C//ratio, k=1)  -> weight (Cr, C), bias (Cr,)
    w1 = jax.random.normal(kw1, (Cr, C), dtype=jnp.float32) * 0.5
    b1 = jax.random.normal(kb1, (Cr,), dtype=jnp.float32) * 0.1
    # fc2: Conv2d(C//ratio, C, k=1)  -> weight (C, Cr), bias (C,)
    w2 = jax.random.normal(kw2, (C, Cr), dtype=jnp.float32) * 0.5
    b2 = jax.random.normal(kb2, (C,), dtype=jnp.float32) * 0.1

    fn = jax.jit(channel_atte)
    out = jax.block_until_ready(fn(x, w1, b1, w2, b2))

    ref = reference(x, w1, b1, w2, b2)
    assert out.shape == x.shape and out.dtype == x.dtype
    assert jnp.allclose(out, ref, atol=1e-5, rtol=1e-5), "mismatch vs reference"

    # Also exercise the ragged-tile path (H*W not a multiple of 128).
    x_r = jax.random.normal(key, (N, C, 10, 12), dtype=jnp.float32)
    out_r = jax.block_until_ready(jax.jit(channel_atte)(x_r, w1, b1, w2, b2))
    ref_r = reference(x_r, w1, b1, w2, b2)
    assert jnp.allclose(out_r, ref_r, atol=1e-5, rtol=1e-5), "mismatch (ragged)"

    print("KERNEL_OK")
</pallas_src>

<mosaic_0001>
module attributes {stable_mosaic.version = 11 : i64} {
  func.func @_pool_kernel(%arg0: i32, %arg1: i32, %arg2: memref<8x256xf32, #tpu.memory_space<vmem>>, %arg3: memref<8x128xf32, #tpu.memory_space<vmem>>, %arg4: memref<8x128xf32, #tpu.memory_space<vmem>>) attributes {dimension_semantics = [#tpu.dimension_semantics<parallel>, #tpu.dimension_semantics<arbitrary>], iteration_bounds = array<i64: 1, 1>, scalar_prefetch = 0 : i64, scratch_operands = 0 : i64, tpu.core_type = #tpu.core_type<tc>, window_params = [{transform_indices = @transform_0, window_bounds = array<i64: 8, 256>}, {transform_indices = @transform_1, window_bounds = array<i64: 8, 128>}, {transform_indices = @transform_2, window_bounds = array<i64: 8, 128>}]} {
    %c0_i32 = arith.constant 0 : i32
    %0 = arith.cmpi eq, %arg1, %c0_i32 : i32
    %1 = arith.extui %0 : i1 to i32
    %c0_i32_0 = arith.constant 0 : i32
    %2 = arith.cmpi ne, %1, %c0_i32_0 : i32
    scf.if %2 {
      %cst = arith.constant 0.000000e+00 : f32
      %14 = vector.broadcast %cst : f32 to vector<8x128xf32>
      %c0_10 = arith.constant 0 : index
      %c0_11 = arith.constant 0 : index
      %15 = vector.load %arg3[%c0_10, %c0_11] : memref<8x128xf32, #tpu.memory_space<vmem>>, vector<8x128xf32>
      tpu.vector_store %arg3[%c0_10, %c0_11], %14 {strides = array<i32>} : memref<8x128xf32, #tpu.memory_space<vmem>>, vector<8x128xf32>,
      %cst_12 = arith.constant 0xFF800000 : f32
      %16 = vector.broadcast %cst_12 : f32 to vector<8x128xf32>
      %c0_13 = arith.constant 0 : index
      %c0_14 = arith.constant 0 : index
      %17 = vector.load %arg4[%c0_13, %c0_14] : memref<8x128xf32, #tpu.memory_space<vmem>>, vector<8x128xf32>
      tpu.vector_store %arg4[%c0_13, %c0_14], %16 {strides = array<i32>} : memref<8x128xf32, #tpu.memory_space<vmem>>, vector<8x128xf32>,
    } else {
    }
    %c0 = arith.constant 0 : index
    %c0_1 = arith.constant 0 : index
    %3 = vector.load %arg2[%c0, %c0_1] : memref<8x256xf32, #tpu.memory_space<vmem>>, vector<8x256xf32>
    %4 = vector.extract_strided_slice %3 {offsets = [0, 0], sizes = [8, 128], strides = [1, 1]} : vector<8x256xf32> to vector<8x128xf32>
    %5 = vector.extract_strided_slice %3 {offsets = [0, 128], sizes = [8, 128], strides = [1, 1]} : vector<8x256xf32> to vector<8x128xf32>
    %6 = arith.addf %4, %5 : vector<8x128xf32>
    %7 = arith.maximumf %4, %5 : vector<8x128xf32>
    %c0_2 = arith.constant 0 : index
    %c0_3 = arith.constant 0 : index
    %8 = vector.load %arg3[%c0_2, %c0_3] : memref<8x128xf32, #tpu.memory_space<vmem>>, vector<8x128xf32>
    %9 = arith.addf %8, %6 : vector<8x128xf32>
    %c0_4 = arith.constant 0 : index
    %c0_5 = arith.constant 0 : index
    %10 = vector.load %arg3[%c0_4, %c0_5] : memref<8x128xf32, #tpu.memory_space<vmem>>, vector<8x128xf32>
    tpu.vector_store %arg3[%c0_4, %c0_5], %9 {strides = array<i32>} : memref<8x128xf32, #tpu.memory_space<vmem>>, vector<8x128xf32>,
    %c0_6 = arith.constant 0 : index
    %c0_7 = arith.constant 0 : index
    %11 = vector.load %arg4[%c0_6, %c0_7] : memref<8x128xf32, #tpu.memory_space<vmem>>, vector<8x128xf32>
    %12 = arith.maximumf %11, %7 : vector<8x128xf32>
    %c0_8 = arith.constant 0 : index
    %c0_9 = arith.constant 0 : index
    %13 = vector.load %arg4[%c0_8, %c0_9] : memref<8x128xf32, #tpu.memory_space<vmem>>, vector<8x128xf32>
    tpu.vector_store %arg4[%c0_8, %c0_9], %12 {strides = array<i32>} : memref<8x128xf32, #tpu.memory_space<vmem>>, vector<8x128xf32>,
    return
  }
  func.func @transform_0(%arg0: i32, %arg1: i32) -> (i32, i32) {
    %c0_i32 = arith.constant 0 : i32
    return %arg0, %arg1 : i32, i32
  }
  func.func @transform_1(%arg0: i32, %arg1: i32) -> (i32, i32) {
    %c0_i32 = arith.constant 0 : i32
    %c0_i32_0 = arith.constant 0 : i32
    return %arg0, %c0_i32 : i32, i32
  }
  func.func @transform_2(%arg0: i32, %arg1: i32) -> (i32, i32) {
    %c0_i32 = arith.constant 0 : i32
    %c0_i32_0 = arith.constant 0 : i32
    return %arg0, %c0_i32 : i32, i32
  }
}

module attributes {stable_mosaic.version = 11 : i64} {
  func.func @_scale_kernel(%arg0: i32, %arg1: i32, %arg2: memref<8x256xf32, #tpu.memory_space<vmem>>, %arg3: memref<8x1xf32, #tpu.memory_space<vmem>>, %arg4: memref<8x256xf32, #tpu.memory_space<vmem>>) attributes {dimension_semantics = [#tpu.dimension_semantics<parallel>, #tpu.dimension_semantics<parallel>], iteration_bounds = array<i64: 1, 1>, scalar_prefetch = 0 : i64, scratch_operands = 0 : i64, tpu.core_type = #tpu.core_type<tc>, window_params = [{transform_indices = @transform_0, window_bounds = array<i64: 8, 256>}, {transform_indices = @transform_1, window_bounds = array<i64: 8, 1>}, {transform_indices = @transform_2, window_bounds = array<i64: 8, 256>}]} {
    %c0 = arith.constant 0 : index
    %c0_0 = arith.constant 0 : index
    %0 = vector.load %arg2[%c0, %c0_0] : memref<8x256xf32, #tpu.memory_space<vmem>>, vector<8x256xf32>
    %c0_1 = arith.constant 0 : index
    %c0_2 = arith.constant 0 : index
    %1 = vector.load %arg3[%c0_1, %c0_2] : memref<8x1xf32, #tpu.memory_space<vmem>>, vector<8x1xf32>
    %2 = vector.broadcast %1 : vector<8x1xf32> to vector<8x256xf32>
    %3 = arith.mulf %0, %2 : vector<8x256xf32>
    %c0_3 = arith.constant 0 : index
    %c0_4 = arith.constant 0 : index
    %4 = vector.load %arg4[%c0_3, %c0_4] : memref<8x256xf32, #tpu.memory_space<vmem>>, vector<8x256xf32>
    tpu.vector_store %arg4[%c0_3, %c0_4], %3 {strides = array<i32>} : memref<8x256xf32, #tpu.memory_space<vmem>>, vector<8x256xf32>,
    return
  }
  func.func @transform_0(%arg0: i32, %arg1: i32) -> (i32, i32) {
    %c0_i32 = arith.constant 0 : i32
    return %arg0, %arg1 : i32, i32
  }
  func.func @transform_1(%arg0: i32, %arg1: i32) -> (i32, i32) {
    %c0_i32 = arith.constant 0 : i32
    %c0_i32_0 = arith.constant 0 : i32
    return %arg0, %c0_i32 : i32, i32
  }
  func.func @transform_2(%arg0: i32, %arg1: i32) -> (i32, i32) {
    %c0_i32 = arith.constant 0 : i32
    return %arg0, %arg1 : i32, i32
  }
}

</mosaic_0001>

<llo_original>
// kernel: channel_atte.2
$region0: #{channel_atte.2}
  #allocation0 [shape = 'u32[]', space=smem, size = 0x4, offset = 0x4, fixed_abs, tag = 'smem constant byte address 0x4 - core index']
  #allocation1 [shape = 'u32[144,128]{1,0:T(1,128)}', space=vmem, size = 0x12000, scoped, tag = 'internal scratch']
  %s0 = inlined_call_operand.vmem [shape: f32[8,256], index: 0, kind: input, shape index: {}]
  %s1 = inlined_call_operand.vmem [shape: f32[8,128], index: 1, kind: output, shape index: {0}]
  %s2 = inlined_call_operand.vmem [shape: f32[8,128], index: 2, kind: output, shape index: {1}]
  %3 = xla_tuple %s1, %s2
  %s4 = sld [smem:[#allocation0]]
  $region26: #{channel_atte.2} parent=0
    _
  %s6 = ssub.s32 1, %s4
  %s7 = scalar_select 0, %s6, %s4
  // Predicated region
  $region2: #{channel_atte.2} parent=0 // pred_check
    _
  $region3: #{channel_atte.2} parent=0 // pred_check_branch
    %9 = sbr.rel (0) target = $region5
  $region4: #{channel_atte.2} parent=0 // pred_region
    _
  $region5: #{channel_atte.2} parent=0 // pred_fallthru
    _
  %p10 = scmp.eq.s32.totalorder 0, 0
  // Predicated region
  $region6: #{channel_atte.2} parent=0 // pred_check
    %p11 = pneg %p10
  $region7: #{channel_atte.2} parent=0 // pred_check_branch
    %13 = sbr.rel (%p11) target = $region9
  $region8: #{channel_atte.2} parent=0 // pred_region
    %14 = vst [vmem:[%s1] sm:$0xff] 0.0
    %15 = vst [vmem:[%s2] sm:$0xff] -inf
  $region9: #{channel_atte.2} parent=0 // pred_fallthru
    _
  %v16 = vld [vmem:[%s0] sm:$0xff]
  %v17 = vld [vmem:[%s0 + $0x8] sm:$0xff]
  %v18 = vadd.f32 %v16, %v17
  %v19 = vmax.f32 %v16, %v17
  %v20 = vld [vmem:[%s1] sm:$0xff]
  %v21 = vadd.f32 %v20, %v18
  %22 = vst [vmem:[%s1] sm:$0xff] %v21
  %v23 = vld [vmem:[%s2] sm:$0xff]
  %v24 = vmax.f32 %v23, %v19
  %25 = vst [vmem:[%s2] sm:$0xff] %v24
  // Predicated region
  $region10: #{channel_atte.2} parent=0 // pred_check
    _
  $region11: #{channel_atte.2} parent=0 // pred_check_branch
    %27 = sbr.rel (0) target = $region13
  $region12: #{channel_atte.2} parent=0 // pred_region
    _
  $region13: #{channel_atte.2} parent=0 // pred_fallthru
    _
  // Predicated region
  $region14: #{channel_atte.2} parent=0 // pred_check
    _
  $region15: #{channel_atte.2} parent=0 // pred_check_branch
    %29 = sbr.rel (0) target = $region17
  $region16: #{channel_atte.2} parent=0 // pred_region
    _
  $region17: #{channel_atte.2} parent=0 // pred_fallthru
    _
  // Predicated region
  $region18: #{channel_atte.2} parent=0 // pred_check
    _
  $region19: #{channel_atte.2} parent=0 // pred_check_branch
    %31 = sbr.rel (0) target = $region21
  $region20: #{channel_atte.2} parent=0 // pred_region
    _
  $region21: #{channel_atte.2} parent=0 // pred_fallthru
    _
  // Predicated region
  $region22: #{channel_atte.2} parent=0 // pred_check
    _
  $region23: #{channel_atte.2} parent=0 // pred_check_branch
    %33 = sbr.rel (0) target = $region25
  $region24: #{channel_atte.2} parent=0 // pred_region
    _
  $region25: #{channel_atte.2} parent=0 // pred_fallthru
    _

// kernel: channel_atte.3
$region0: #{channel_atte.3}
  #allocation0 [shape = 'u32[]', space=smem, size = 0x4, offset = 0x4, fixed_abs, tag = 'smem constant byte address 0x4 - core index']
  #allocation1 [shape = 'u32[144,128]{1,0:T(1,128)}', space=vmem, size = 0x12000, scoped, tag = 'internal scratch']
  %s0 = inlined_call_operand.vmem [shape: f32[8,256], index: 0, kind: input, shape index: {}]
  %s1 = inlined_call_operand.vmem [shape: f32[8,1], index: 1, kind: input, shape index: {}]
  %s2 = inlined_call_operand.vmem [shape: f32[8,256], index: 2, kind: output, shape index: {}]
  %s3 = sld [smem:[#allocation0]]
  $region18: #{channel_atte.3} parent=0
    _
  %s5 = ssub.s32 1, %s3
  %s6 = scalar_select 0, %s5, %s3
  // Predicated region
  $region2: #{channel_atte.3} parent=0 // pred_check
    _
  $region3: #{channel_atte.3} parent=0 // pred_check_branch
    %8 = sbr.rel (0) target = $region5
  $region4: #{channel_atte.3} parent=0 // pred_region
    _
  $region5: #{channel_atte.3} parent=0 // pred_fallthru
    _
  // Predicated region
  $region6: #{channel_atte.3} parent=0 // pred_check
    _
  $region7: #{channel_atte.3} parent=0 // pred_check_branch
    %10 = sbr.rel (0) target = $region9
  $region8: #{channel_atte.3} parent=0 // pred_region
    _
  $region9: #{channel_atte.3} parent=0 // pred_fallthru
    _
  %v11 = vld [vmem:[%s0] sm:$0xff]
  %v12 = vld [vmem:[%s0 + $0x8] sm:$0xff]
  %v13 = vld [vmem:[%s1] sm:$0xff]
  %15 = vset.pattern.permute.xlu0 0
  %16 = vperm.xlu0 %15, %v13
  %v17 = vpop.permute.xlu0 %16
  %v19 = vmul.f32 %v11, %v17
  %v20 = vmul.f32 %v12, %v17
  %21 = vst [vmem:[%s2] sm:$0xff] %v19
  %22 = vst [vmem:[%s2 + $0x8] sm:$0xff] %v20
  // Predicated region
  $region10: #{channel_atte.3} parent=0 // pred_check
    _
  $region11: #{channel_atte.3} parent=0 // pred_check_branch
    %24 = sbr.rel (0) target = $region13
  $region12: #{channel_atte.3} parent=0 // pred_region
    _
  $region13: #{channel_atte.3} parent=0 // pred_fallthru
    _
  // Predicated region
  $region14: #{channel_atte.3} parent=0 // pred_check
    _
  $region15: #{channel_atte.3} parent=0 // pred_check_branch
    %26 = sbr.rel (0) target = $region17
  $region16: #{channel_atte.3} parent=0 // pred_region
    _
  $region17: #{channel_atte.3} parent=0 // pred_fallthru
    _

</llo_original>
